<compile_context>
chip_gen: v7x
topology: tpu7x:2x2x1
jax: 0.10.0
libtpu: 0.0.40
codegen_flags: <defaults>
</compile_context>

<pallas_src>
import jax
import jax.numpy as jnp
from jax.experimental import pallas as pl
from jax.experimental.pallas import tpu as pltpu


def _decoder_kernel(x_ref, w_ref, b_ref, o_ref):
    # x_ref: (N, H, W, C) f32  -- lane-dense: minor dims (W, C) = (16, 256)
    # w_ref: (C, Vpad)    f32  -- Conv 1x1 weight, transposed + zero-padded
    # b_ref: (1, Vpad)    f32  -- bias, padded lanes hold -1e30
    # o_ref: (N*W, Vpad)  f32  -- log-probabilities, lane-dense
    n, h, w, c = x_ref.shape

    # AdaptiveAvgPool2d((1, None)): mean over H (leading axis -> dense VPU adds).
    xm = jnp.mean(x_ref[...], axis=1)                    # (N, W, C)
    xm = xm.reshape(n * w, c)                            # (N*W, C), cheap: W % 8 == 0

    # 1x1 conv == channel matmul on the MXU, f32 accumulation.
    logits = jnp.dot(xm, w_ref[...],
                     preferred_element_type=jnp.float32)  # (N*W, Vpad)
    logits = logits + b_ref[...]                          # padded lanes -> -1e30

    # log_softmax over the (padded) vocab axis; padded lanes contribute
    # exp(-huge) == 0 to the sum and never win the max.
    m = jnp.max(logits, axis=-1, keepdims=True)
    z = logits - m
    lse = jnp.log(jnp.sum(jnp.exp(z), axis=-1, keepdims=True))
    o_ref[...] = (z - lse).astype(o_ref.dtype)


def decoder_forward(x_nchw, weight, bias):
    """x_nchw: (N, C, H, W) float32 (PyTorch layout).
    weight:   (Vp, C) — Conv2d(256, Vp, kernel_size=1) weight, squeezed.
    bias:     (Vp,)
    returns:  (N, Vp, W) log-probabilities over dim=1 (matches PyTorch)."""
    N, C, H, W = x_nchw.shape
    Vp = weight.shape[0]
    Vpad = pl.cdiv(Vp, 128) * 128                         # lane-dense vocab axis

    # Layout plumbing (wrapper-side, tiny):
    # x -> NHWC so C=256 is the lane axis (fully dense VMEM tiles).
    x_nhwc = jnp.transpose(x_nchw, (0, 2, 3, 1))          # (N, H, W, C)
    # Weight: (Vp, C) -> (C, Vpad), zero-padded columns.
    w_pad = jnp.zeros((C, Vpad), jnp.float32).at[:, :Vp].set(weight.T)
    # Bias: padded vocab lanes get -1e30 (finite) -> no in-kernel mask needed.
    b_pad = jnp.full((1, Vpad), -1e30, jnp.float32).at[:, :Vp].set(bias[None, :])

    # TODO(synk): if N (or N*W) grows large, switch to a "parallel" grid over
    # batch tiles (2 TCs on v7x) and per-tile x blocks to bound VMEM residency.
    out2d = pl.pallas_call(
        _decoder_kernel,
        out_shape=jax.ShapeDtypeStruct((N * W, Vpad), jnp.float32),
        grid_spec=pltpu.PrefetchScalarGridSpec(
            num_scalar_prefetch=0,
            grid=(1,),                                    # single fused step
            in_specs=[
                pl.BlockSpec((N, H, W, C), lambda i: (0, 0, 0, 0)),
                pl.BlockSpec((C, Vpad), lambda i: (0, 0)),
                pl.BlockSpec((1, Vpad), lambda i: (0, 0)),
            ],
            out_specs=pl.BlockSpec((N * W, Vpad), lambda i: (0, 0)),
        ),
        compiler_params=pltpu.CompilerParams(
            dimension_semantics=("arbitrary",)),
    )(x_nhwc, w_pad, b_pad)

    # Tiny output relayout: drop padded vocab lanes, back to (N, Vp, W).
    return out2d[:, :Vp].reshape(N, W, Vp).transpose(0, 2, 1)


def _reference(x_nchw, weight, bias):
    # Pure-JAX reference mirroring the PyTorch forward (f32, highest precision).
    x = jnp.mean(x_nchw, axis=2, keepdims=True)                       # (N,C,1,W)
    y = jnp.einsum('nchw,vc->nvhw', x, weight,
                   precision='highest') + bias[None, :, None, None]
    y = jnp.squeeze(y, axis=2)                                        # (N,Vp,W)
    return jax.nn.log_softmax(y, axis=1)


if __name__ == "__main__":
    key = jax.random.PRNGKey(0)
    k_x, k_w, k_b = jax.random.split(key, 3)

    # Module-implied shapes: in_channels fixed at 256; everything else small.
    N, C, H, W = 2, 256, 4, 16
    vocab_size = 31
    Vp = vocab_size + 1

    x = jax.random.normal(k_x, (N, C, H, W), dtype=jnp.float32)
    weight = jax.random.normal(k_w, (Vp, C), dtype=jnp.float32) * 0.05
    bias = jax.random.normal(k_b, (Vp,), dtype=jnp.float32) * 0.1

    out = jax.block_until_ready(decoder_forward(x, weight, bias))
    ref = _reference(x, weight, bias)

    assert out.shape == (N, Vp, W), out.shape
    # f32 matmul path -> tight tolerance.
    assert jnp.allclose(out, ref, atol=1e-3, rtol=1e-3), "mismatch vs reference"

    print("KERNEL_OK")
</pallas_src>

<mosaic_0001>
module attributes {stable_mosaic.version = 11 : i64} {
  func.func @_decoder_kernel(%arg0: i32, %arg1: memref<2x4x16x256xf32, #tpu.memory_space<vmem>>, %arg2: memref<256x128xf32, #tpu.memory_space<vmem>>, %arg3: memref<1x128xf32, #tpu.memory_space<vmem>>, %arg4: memref<32x128xf32, #tpu.memory_space<vmem>>) attributes {dimension_semantics = [#tpu.dimension_semantics<arbitrary>], iteration_bounds = array<i64: 1>, scalar_prefetch = 0 : i64, scratch_operands = 0 : i64, tpu.core_type = #tpu.core_type<tc>, window_params = [{pipeline_mode = #tpu.pipeline_mode<synchronous>, transform_indices = @transform_0, window_bounds = array<i64: 2, 4, 16, 256>}, {pipeline_mode = #tpu.pipeline_mode<synchronous>, transform_indices = @transform_1, window_bounds = array<i64: 256, 128>}, {pipeline_mode = #tpu.pipeline_mode<synchronous>, transform_indices = @transform_2, window_bounds = array<i64: 1, 128>}, {pipeline_mode = #tpu.pipeline_mode<synchronous>, transform_indices = @transform_3, window_bounds = array<i64: 32, 128>}]} {
    %c0 = arith.constant 0 : index
    %c0_0 = arith.constant 0 : index
    %c0_1 = arith.constant 0 : index
    %c0_2 = arith.constant 0 : index
    %0 = vector.load %arg1[%c0, %c0_0, %c0_1, %c0_2] : memref<2x4x16x256xf32, #tpu.memory_space<vmem>>, vector<2x4x16x256xf32>
    %cst = arith.constant dense<0.000000e+00> : vector<2x16x256xf32>
    %1 = vector.multi_reduction <add>, %0, %cst [1] : vector<2x4x16x256xf32> to vector<2x16x256xf32>
    %cst_3 = arith.constant 4.000000e+00 : f32
    %2 = vector.broadcast %cst_3 : f32 to vector<2x16x256xf32>
    %3 = arith.divf %1, %2 : vector<2x16x256xf32>
    %4 = vector.shape_cast %3 : vector<2x16x256xf32> to vector<32x256xf32>
    %c0_4 = arith.constant 0 : index
    %c0_5 = arith.constant 0 : index
    %5 = vector.load %arg2[%c0_4, %c0_5] : memref<256x128xf32, #tpu.memory_space<vmem>>, vector<256x128xf32>
    %cst_6 = arith.constant dense<0.000000e+00> : vector<32x128xf32>
    %6 = tpu.matmul %4, %5, %cst_6 {dimension_numbers = #tpu.dot_dimension_numbers<[1], [0], [0], [1], [0, 0, 1, 1], [], []>} : vector<32x256xf32>, vector<256x128xf32>, vector<32x128xf32> -> vector<32x128xf32>
    %c0_7 = arith.constant 0 : index
    %c0_8 = arith.constant 0 : index
    %7 = vector.load %arg3[%c0_7, %c0_8] : memref<1x128xf32, #tpu.memory_space<vmem>>, vector<1x128xf32>
    %8 = vector.broadcast %7 : vector<1x128xf32> to vector<32x128xf32>
    %9 = arith.addf %6, %8 : vector<32x128xf32>
    %cst_9 = arith.constant dense<0xFF800000> : vector<32xf32>
    %10 = vector.multi_reduction <maximumf>, %9, %cst_9 [1] : vector<32x128xf32> to vector<32xf32>
    %11 = vector.shape_cast %10 : vector<32xf32> to vector<32x1xf32>
    %12 = vector.broadcast %11 : vector<32x1xf32> to vector<32x128xf32>
    %13 = arith.subf %9, %12 : vector<32x128xf32>
    %14 = math.exp %13 : vector<32x128xf32>
    %cst_10 = arith.constant dense<0.000000e+00> : vector<32xf32>
    %15 = vector.multi_reduction <add>, %14, %cst_10 [1] : vector<32x128xf32> to vector<32xf32>
    %16 = vector.shape_cast %15 : vector<32xf32> to vector<32x1xf32>
    %17 = math.log %16 : vector<32x1xf32>
    %18 = vector.broadcast %17 : vector<32x1xf32> to vector<32x128xf32>
    %19 = arith.subf %13, %18 : vector<32x128xf32>
    %c0_11 = arith.constant 0 : index
    %c0_12 = arith.constant 0 : index
    %20 = vector.load %arg4[%c0_11, %c0_12] : memref<32x128xf32, #tpu.memory_space<vmem>>, vector<32x128xf32>
    tpu.vector_store %arg4[%c0_11, %c0_12], %19 {strides = array<i32>} : memref<32x128xf32, #tpu.memory_space<vmem>>, vector<32x128xf32>,
    return
  }
  func.func @transform_0(%arg0: i32) -> (i32, i32, i32, i32) {
    %c0_i32 = arith.constant 0 : i32
    %c0_i32_0 = arith.constant 0 : i32
    %c0_i32_1 = arith.constant 0 : i32
    %c0_i32_2 = arith.constant 0 : i32
    %c0_i32_3 = arith.constant 0 : i32
    return %c0_i32, %c0_i32_0, %c0_i32_1, %c0_i32_2 : i32, i32, i32, i32
  }
  func.func @transform_1(%arg0: i32) -> (i32, i32) {
    %c0_i32 = arith.constant 0 : i32
    %c0_i32_0 = arith.constant 0 : i32
    %c0_i32_1 = arith.constant 0 : i32
    return %c0_i32, %c0_i32_0 : i32, i32
  }
  func.func @transform_2(%arg0: i32) -> (i32, i32) {
    %c0_i32 = arith.constant 0 : i32
    %c0_i32_0 = arith.constant 0 : i32
    %c0_i32_1 = arith.constant 0 : i32
    return %c0_i32, %c0_i32_0 : i32, i32
  }
  func.func @transform_3(%arg0: i32) -> (i32, i32) {
    %c0_i32 = arith.constant 0 : i32
    %c0_i32_0 = arith.constant 0 : i32
    %c0_i32_1 = arith.constant 0 : i32
    return %c0_i32, %c0_i32_0 : i32, i32
  }
}

</mosaic_0001>

<llo_original>
// kernel: tpu_custom_call.1
$region0: #{tpu_custom_call.1}
  #allocation0 [shape = 'u32[]', space=smem, size = 0x4, offset = 0x4, fixed_abs, tag = 'smem constant byte address 0x4 - core index']
  #allocation1 [shape = 'u32[144,128]{1,0:T(1,128)}', space=vmem, size = 0x12000, scoped, tag = 'internal scratch']
  %s0 = inlined_call_operand.hbm [shape: f32[2,4,16,256], index: 0, kind: input, shape index: {}]
  %s1 = inlined_call_operand.hbm [shape: f32[256,128], index: 1, kind: input, shape index: {}]
  %s2 = inlined_call_operand.vmem [shape: f32[1,128], index: 2, kind: input, shape index: {}]
  %s3 = inlined_call_operand.hbm [shape: f32[32,128], index: 3, kind: output, shape index: {}]
  %s4 = sld [smem:[#allocation0]]
  $region30: #{tpu_custom_call.1} parent=0
    _
  %s6 = ssub.s32 1, %s4
  %s7 = scalar_select 0, %s6, %s4
  $region1: #{tpu_custom_call.1} parent=0
    #allocation2 [shape = 'u8[131072]{0}', space=vmem, size = 0x20000, scoped, tag = 'input window, operand 0, single buffered']
    #allocation3 [shape = 's32[1]{0}', space=sflag, size = 0x4, scoped, tag = 'scoped memory for tpu_custom_call.1']
    #allocation4 [shape = 's32[1]{0}', space=sflag, size = 0x4, scoped, tag = 'scoped memory for tpu_custom_call.1']
    #allocation5 [shape = 'u8[131072]{0}', space=vmem, size = 0x20000, scoped, tag = 'input window, operand 1, single buffered']
    #allocation6 [shape = 's32[1]{0}', space=sflag, size = 0x4, scoped, tag = 'scoped memory for tpu_custom_call.1']
    #allocation7 [shape = 'u8[16384]{0}', space=vmem, size = 0x4000, scoped, tag = 'output window, operand 0, single buffered']
    %8 = vsyncpa [#allocation3], 0
    %9 = vsyncpa [#allocation6], 0
    %10 = vsyncpa [#allocation4], 0
    // Predicated region
    $region2: #{tpu_custom_call.1} parent=1 // pred_check
      _
    $region3: #{tpu_custom_call.1} parent=1 // pred_check_branch
      %12 = sbr.rel (0) target = $region5
    $region4: #{tpu_custom_call.1} parent=1 // pred_region
      %s14 = ssub.s32 4096, 4096
      %15 = vsyncadd [#allocation3], %s14
      %s16 = sshll.u32 [#allocation2], 4
      %s17 = int_to_ptr.vmem [resolvable:$true] %s16
      %22 = dma.hbm_to_vmem [thread:$0]  %s0, 4096, %s17, [#allocation3], 256, 256, 16
    $region5: #{tpu_custom_call.1} parent=1 // pred_fallthru
      _
    // Predicated region
    $region6: #{tpu_custom_call.1} parent=1 // pred_check
      _
    $region7: #{tpu_custom_call.1} parent=1 // pred_check_branch
      %24 = sbr.rel (0) target = $region9
    $region8: #{tpu_custom_call.1} parent=1 // pred_region
      %s26 = ssub.s32 4096, 4096
      %27 = vsyncadd [#allocation6], %s26
      %s28 = sshll.u32 [#allocation5], 4
      %s29 = int_to_ptr.vmem [resolvable:$true] %s28
      %34 = dma.hbm_to_vmem [thread:$0]  %s1, 4096, %s29, [#allocation6], 128, 128, 8
    $region9: #{tpu_custom_call.1} parent=1 // pred_fallthru
      _
    // Predicated region
    $region10: #{tpu_custom_call.1} parent=1 // pred_check
      _
    $region11: #{tpu_custom_call.1} parent=1 // pred_check_branch
      %36 = sbr.rel (0) target = $region13
    $region12: #{tpu_custom_call.1} parent=1 // pred_region
      _
    $region13: #{tpu_custom_call.1} parent=1 // pred_fallthru
      _
    // Predicated region
    $region14: #{tpu_custom_call.1} parent=1 // pred_check
      _
    $region15: #{tpu_custom_call.1} parent=1 // pred_check_branch
      %38 = sbr.rel (0) target = $region17
    $region16: #{tpu_custom_call.1} parent=1 // pred_region
      %39 = dma.done [#allocation3], 4096
    $region17: #{tpu_custom_call.1} parent=1 // pred_fallthru
      _
    // Predicated region
    $region18: #{tpu_custom_call.1} parent=1 // pred_check
      _
    $region19: #{tpu_custom_call.1} parent=1 // pred_check_branch
      %41 = sbr.rel (0) target = $region21
    $region20: #{tpu_custom_call.1} parent=1 // pred_region
      %42 = dma.done [#allocation6], 4096
    $region21: #{tpu_custom_call.1} parent=1 // pred_fallthru
      _
    %v43 = vld [vmem:[#allocation2] sm:$0xff]
    %v44 = vld [vmem:[#allocation2 + $0x8] sm:$0xff]
    %v45 = vld [vmem:[#allocation2 + $0x10] sm:$0xff]
    %v46 = vld [vmem:[#allocation2 + $0x18] sm:$0xff]
    %v47 = vld [vmem:[#allocation2 + $0x20] sm:$0xff]
    %v48 = vld [vmem:[#allocation2 + $0x28] sm:$0xff]
    %v49 = vld [vmem:[#allocation2 + $0x30] sm:$0xff]
    %v50 = vld [vmem:[#allocation2 + $0x38] sm:$0xff]
    %v51 = vld [vmem:[#allocation2 + $0x40] sm:$0xff]
    %v52 = vld [vmem:[#allocation2 + $0x48] sm:$0xff]
    %v53 = vld [vmem:[#allocation2 + $0x50] sm:$0xff]
    %v54 = vld [vmem:[#allocation2 + $0x58] sm:$0xff]
    %v55 = vld [vmem:[#allocation2 + $0x60] sm:$0xff]
    %v56 = vld [vmem:[#allocation2 + $0x68] sm:$0xff]
    %v57 = vld [vmem:[#allocation2 + $0x70] sm:$0xff]
    %v58 = vld [vmem:[#allocation2 + $0x78] sm:$0xff]
    %v59 = vld [vmem:[#allocation2 + $0x80] sm:$0xff]
    %v60 = vld [vmem:[#allocation2 + $0x88] sm:$0xff]
    %v61 = vld [vmem:[#allocation2 + $0x90] sm:$0xff]
    %v62 = vld [vmem:[#allocation2 + $0x98] sm:$0xff]
    %v63 = vld [vmem:[#allocation2 + $0xa0] sm:$0xff]
    %v64 = vld [vmem:[#allocation2 + $0xa8] sm:$0xff]
    %v65 = vld [vmem:[#allocation2 + $0xb0] sm:$0xff]
    %v66 = vld [vmem:[#allocation2 + $0xb8] sm:$0xff]
    %v67 = vld [vmem:[#allocation2 + $0xc0] sm:$0xff]
    %v68 = vld [vmem:[#allocation2 + $0xc8] sm:$0xff]
    %v69 = vld [vmem:[#allocation2 + $0xd0] sm:$0xff]
    %v70 = vld [vmem:[#allocation2 + $0xd8] sm:$0xff]
    %v71 = vld [vmem:[#allocation2 + $0xe0] sm:$0xff]
    %v72 = vld [vmem:[#allocation2 + $0xe8] sm:$0xff]
    %v73 = vld [vmem:[#allocation2 + $0xf0] sm:$0xff]
    %v74 = vld [vmem:[#allocation2 + $0xf8] sm:$0xff]
    %v75 = vadd.f32 %v43, %v47
    %v76 = vadd.f32 %v75, %v51
    %v77 = vadd.f32 %v76, %v55
    %v78 = vadd.f32 %v44, %v48
    %v79 = vadd.f32 %v78, %v52
    %v80 = vadd.f32 %v79, %v56
    %v81 = vadd.f32 %v45, %v49
    %v82 = vadd.f32 %v81, %v53
    %v83 = vadd.f32 %v82, %v57
    %v84 = vadd.f32 %v46, %v50
    %v85 = vadd.f32 %v84, %v54
    %v86 = vadd.f32 %v85, %v58
    %v87 = vadd.f32 %v59, %v63
    %v88 = vadd.f32 %v87, %v67
    %v89 = vadd.f32 %v88, %v71
    %v90 = vadd.f32 %v60, %v64
    %v91 = vadd.f32 %v90, %v68
    %v92 = vadd.f32 %v91, %v72
    %v93 = vadd.f32 %v61, %v65
    %v94 = vadd.f32 %v93, %v69
    %v95 = vadd.f32 %v94, %v73
    %v96 = vadd.f32 %v62, %v66
    %v97 = vadd.f32 %v96, %v70
    %v98 = vadd.f32 %v97, %v74
    %v99 = vrcp.pop 4.0
    %v100 = vmul.f32 %v77, %v99
    %v101 = vmul.f32 %v80, %v99
    %v102 = vmul.f32 %v83, %v99
    %v103 = vmul.f32 %v86, %v99
    %v104 = vmul.f32 %v89, %v99
    %v105 = vmul.f32 %v92, %v99
    %v106 = vmul.f32 %v95, %v99
    %v107 = vmul.f32 %v98, %v99
    %v108 = vld [vmem:[#allocation5] sm:$0xff]
    %v109 = vld [vmem:[#allocation5 + $0x8] sm:$0xff]
    %v110 = vld [vmem:[#allocation5 + $0x10] sm:$0xff]
    %v111 = vld [vmem:[#allocation5 + $0x18] sm:$0xff]
    %v112 = vld [vmem:[#allocation5 + $0x20] sm:$0xff]
    %v113 = vld [vmem:[#allocation5 + $0x28] sm:$0xff]
    %v114 = vld [vmem:[#allocation5 + $0x30] sm:$0xff]
    %v115 = vld [vmem:[#allocation5 + $0x38] sm:$0xff]
    %v116 = vld [vmem:[#allocation5 + $0x40] sm:$0xff]
    %v117 = vld [vmem:[#allocation5 + $0x48] sm:$0xff]
    %v118 = vld [vmem:[#allocation5 + $0x50] sm:$0xff]
    %v119 = vld [vmem:[#allocation5 + $0x58] sm:$0xff]
    %v120 = vld [vmem:[#allocation5 + $0x60] sm:$0xff]
    %v121 = vld [vmem:[#allocation5 + $0x68] sm:$0xff]
    %v122 = vld [vmem:[#allocation5 + $0x70] sm:$0xff]
    %v123 = vld [vmem:[#allocation5 + $0x78] sm:$0xff]
    %v124 = vld [vmem:[#allocation5 + $0x80] sm:$0xff]
    %v125 = vld [vmem:[#allocation5 + $0x88] sm:$0xff]
    %v126 = vld [vmem:[#allocation5 + $0x90] sm:$0xff]
    %v127 = vld [vmem:[#allocation5 + $0x98] sm:$0xff]
    %v128 = vld [vmem:[#allocation5 + $0xa0] sm:$0xff]
    %v129 = vld [vmem:[#allocation5 + $0xa8] sm:$0xff]
    %v130 = vld [vmem:[#allocation5 + $0xb0] sm:$0xff]
    %v131 = vld [vmem:[#allocation5 + $0xb8] sm:$0xff]
    %v132 = vld [vmem:[#allocation5 + $0xc0] sm:$0xff]
    %v133 = vld [vmem:[#allocation5 + $0xc8] sm:$0xff]
    %v134 = vld [vmem:[#allocation5 + $0xd0] sm:$0xff]
    %v135 = vld [vmem:[#allocation5 + $0xd8] sm:$0xff]
    %v136 = vld [vmem:[#allocation5 + $0xe0] sm:$0xff]
    %v137 = vld [vmem:[#allocation5 + $0xe8] sm:$0xff]
    %v138 = vld [vmem:[#allocation5 + $0xf0] sm:$0xff]
    %v139 = vld [vmem:[#allocation5 + $0xf8] sm:$0xff]
    %v140 = vld [vmem:[%s2] sm:$0x1]
    %v142 = vlaneseq
    %v143 = vshrl.u32 %v142, 7
    %v144 = vsub.s32 0, %v143
    %v145 = vrot.slane %v140, %v144
    %147 = vmatprep.subr.mxu0 0.0
    %148 = vmatpush1.msra.mxu0 %v108
    %149 = vmatprep.subr.mxu0 0.0
    %150 = vmatpush1.msra.mxu0 %v109
    %151 = vmatprep.subr.mxu0 0.0
    %152 = vmatpush1.msra.mxu0 %v110
    %153 = vmatprep.subr.mxu0 0.0
    %154 = vmatpush1.msra.mxu0 %v111
    %155 = vmatprep.subr.mxu0 0.0
    %156 = vmatpush1.msra.mxu0 %v112
    %157 = vmatprep.subr.mxu0 0.0
    %158 = vmatpush1.msra.mxu0 %v113
    %159 = vmatprep.subr.mxu0 0.0
    %160 = vmatpush1.msra.mxu0 %v114
    %161 = vmatprep.subr.mxu0 0.0
    %162 = vmatpush1.msra.mxu0 %v115
    %163 = vmatprep.subr.mxu0 0.0
    %164 = vmatpush1.msra.mxu0 %v116
    %165 = vmatprep.subr.mxu0 0.0
    %166 = vmatpush1.msra.mxu0 %v117
    %167 = vmatprep.subr.mxu0 0.0
    %168 = vmatpush1.msra.mxu0 %v118
    %169 = vmatprep.subr.mxu0 0.0
    %170 = vmatpush1.msra.mxu0 %v119
    %171 = vmatprep.subr.mxu0 0.0
    %172 = vmatpush1.msra.mxu0 %v120
    %173 = vmatprep.subr.mxu0 0.0
    %174 = vmatpush1.msra.mxu0 %v121
    %175 = vmatprep.subr.mxu0 0.0
    %176 = vmatpush1.msra.mxu0 %v122
    %177 = vmatprep.subr.mxu0 0.0
    %178 = vmatpush1.msra.mxu0 %v123
    %179 = vmatprep.subr.mxu0 0.0
    %180 = vmatpush1.msra.mxu0 %v124
    %181 = vmatprep.subr.mxu0 0.0
    %182 = vmatpush1.msra.mxu0 %v125
    %183 = vmatprep.subr.mxu0 0.0
    %184 = vmatpush1.msra.mxu0 %v126
    %185 = vmatprep.subr.mxu0 0.0
    %186 = vmatpush1.msra.mxu0 %v127
    %187 = vmatprep.subr.mxu0 0.0
    %188 = vmatpush1.msra.mxu0 %v128
    %189 = vmatprep.subr.mxu0 0.0
    %190 = vmatpush1.msra.mxu0 %v129
    %191 = vmatprep.subr.mxu0 0.0
    %192 = vmatpush1.msra.mxu0 %v130
    %193 = vmatprep.subr.mxu0 0.0
    %194 = vmatpush1.msra.mxu0 %v131
    %195 = vmatprep.subr.mxu0 0.0
    %196 = vmatpush1.msra.mxu0 %v132
    %197 = vmatprep.subr.mxu0 0.0
    %198 = vmatpush1.msra.mxu0 %v133
    %199 = vmatprep.subr.mxu0 0.0
    %200 = vmatpush1.msra.mxu0 %v134
    %201 = vmatprep.subr.mxu0 0.0
    %202 = vmatpush1.msra.mxu0 %v135
    %203 = vmatprep.subr.mxu0 0.0
    %204 = vmatpush1.msra.mxu0 %v136
    %205 = vmatprep.subr.mxu0 0.0
    %206 = vmatpush1.msra.mxu0 %v137
    %207 = vmatprep.subr.mxu0 0.0
    %208 = vmatpush1.msra.mxu0 %v138
    %209 = vmatprep.subr.mxu0 0.0
    %210 = vmatpush1.msra.mxu0 %v139
    %211 = vmatprep.mubr.f32.mxu0 %v101
    %212 = vmatmul.mubr.f32.gmra.mrb[0].mxu0 %v100
    %v213 = vpop.f32.mrb[0].mxu0
    %v214 = vadd.f32 %v145, %v213
    %v215 = vpop.f32.mrb[0].mxu0
    %216 = vmatprep.mubr.f32.mxu0 %v103
    %217 = vmatmul.mubr.f32.gmra.mrb[0].mxu0 %v102
    %v218 = vpop.f32.mrb[0].mxu0
    %v219 = vadd.f32 %v145, %v218
    %v220 = vpop.f32.mrb[0].mxu0
    %221 = vmatprep.mubr.f32.mxu0 %v105
    %222 = vmatmul.mubr.f32.gmra.mrb[0].mxu0 %v104
    %v223 = vpop.f32.mrb[0].mxu0
    %v224 = vadd.f32 %v145, %v223
    %v225 = vpop.f32.mrb[0].mxu0
    %226 = vmatprep.mubr.f32.mxu0 %v107
    %227 = vmatmul.mubr.f32.gmra.mrb[0].mxu0 %v106
    %v228 = vpop.f32.mrb[0].mxu0
    %v229 = vadd.f32 %v145, %v228
    %v230 = vpop.f32.mrb[0].mxu0
    %231 = vdwg.mxu0
    %232 = vmax.xlane.f32.xlu0 %v214
    %v233 = vpop.xlane.xlu0 %232
    %234 = vmax.xlane.f32.xlu0 %v219
    %v235 = vpop.xlane.xlu0 %234
    %236 = vmax.xlane.f32.xlu0 %v224
    %v237 = vpop.xlane.xlu0 %236
    %238 = vmax.xlane.f32.xlu0 %v229
    %v239 = vpop.xlane.xlu0 %238
    %v240 = vsub.f32 %v214, %v233
    %v241 = vsub.f32 %v219, %v235
    %v242 = vsub.f32 %v224, %v237
    %v243 = vsub.f32 %v229, %v239
    %v244 = vmul.f32 %v240, 1.442695
    %v245 = vpow.pop %v244
    %v246 = vmul.f32 %v241, 1.442695
    %v247 = vpow.pop %v246
    %v248 = vmul.f32 %v242, 1.442695
    %v249 = vpow.pop %v248
    %v250 = vmul.f32 %v243, 1.442695
    %v251 = vpow.pop %v250
    %252 = vadd.xlane.f32.xlu0 %v245
    %v253 = vpop.xlane.xlu0 %252
    %254 = vadd.xlane.f32.xlu0 %v247
    %v255 = vpop.xlane.xlu0 %254
    %256 = vadd.xlane.f32.xlu0 %v249
    %v257 = vpop.xlane.xlu0 %256
    %258 = vadd.xlane.f32.xlu0 %v251
    %v259 = vpop.xlane.xlu0 %258
    %v260 = vlog2.pop %v253
    %v261 = vmul.f32 %v260, 0.6931472
    %v262 = vlog2.pop %v255
    %v263 = vmul.f32 %v262, 0.6931472
    %v264 = vlog2.pop %v257
    %v265 = vmul.f32 %v264, 0.6931472
    %v266 = vlog2.pop %v259
    %v267 = vmul.f32 %v266, 0.6931472
    %v268 = vsub.f32 %v240, %v261
    %v269 = vsub.f32 %v241, %v263
    %v270 = vsub.f32 %v242, %v265
    %v271 = vsub.f32 %v243, %v267
    %272 = vst [vmem:[#allocation7] sm:$0xff] %v268
    %273 = vst [vmem:[#allocation7 + $0x8] sm:$0xff] %v269
    %274 = vst [vmem:[#allocation7 + $0x10] sm:$0xff] %v270
    %275 = vst [vmem:[#allocation7 + $0x18] sm:$0xff] %v271
    // Predicated region
    $region22: #{tpu_custom_call.1} parent=1 // pred_check
      _
    $region23: #{tpu_custom_call.1} parent=1 // pred_check_branch
      %277 = sbr.rel (0) target = $region25
    $region24: #{tpu_custom_call.1} parent=1 // pred_region
      %s279 = ssub.s32 512, 512
      %280 = vsyncadd [#allocation4], %s279
      %s281 = sshll.u32 [#allocation7], 4
      %s282 = int_to_ptr.vmem [resolvable:$true] %s281
      %287 = dma.vmem_to_hbm [thread:$0]  %s282, 512, %s3, [#allocation4], 128, 128, 8
    $region25: #{tpu_custom_call.1} parent=1 // pred_fallthru
      _
    // Predicated region
    $region26: #{tpu_custom_call.1} parent=1 // pred_check
      _
    $region27: #{tpu_custom_call.1} parent=1 // pred_check_branch
      %289 = sbr.rel (0) target = $region29
    $region28: #{tpu_custom_call.1} parent=1 // pred_region
      %290 = dma.done [#allocation4], 512
    $region29: #{tpu_custom_call.1} parent=1 // pred_fallthru
      _
    %291 = vsyncpa [#allocation3], 1
    %292 = vsyncpa [#allocation6], 1
    %293 = vsyncpa [#allocation4], 1

</llo_original>
